<compile_context>
chip_gen: v5e
topology: v5e:2x2
jax: 0.10.0
libtpu: 0.0.40
codegen_flags: <defaults>
</compile_context>

<pallas_src>
import jax
import jax.numpy as jnp
from jax.experimental import pallas as pl
from jax.experimental.pallas import tpu as pltpu


def _round_up(x, m):
    return (x + m - 1) // m * m


def film_kernel(cv_ref, w_ref, fm_ref, out_ref):
    # cv:  (TB, K+1)   bf16 condition vector with a trailing ones column
    # w:   (K+1, 2*C4) bf16 fused weights: [W_had.T | W_add.T] with biases as
    #                  the last row
    # fm:  (TB, C4)    f32 flattened feature map
    # out: (TB, C4)    f32 FiLM-modulated feature map
    c4 = fm_ref.shape[-1]
    y = jnp.dot(cv_ref[...], w_ref[...], preferred_element_type=jnp.float32)
    hadamard = y[:, :c4]   # lane-aligned static slice (c4 is a multiple of 128)
    added = y[:, c4:]
    out_ref[...] = fm_ref[...] * hadamard + added


def prepare_wide_film_params(w_had, b_had, w_add, b_add):
    """One-time parameter prep (hoisted out of the per-call path).

    w_had / w_add: PyTorch Linear weights of shape (C4, K).
    b_had / b_add: biases of shape (C4,).
    Returns the fused bf16 weight of shape (K+1, 2*C4):
      rows 0..K-1 = [W_had.T | W_add.T], row K = [b_had | b_add].
    """
    C4, K = w_had.shape
    assert w_add.shape == (C4, K)
    w_rows = jnp.concatenate([w_had.T, w_add.T], axis=1)                 # (K, 2*C4)
    b_row = jnp.concatenate([b_had[None, :], b_add[None, :]], axis=1)    # (1, 2*C4)
    return jnp.concatenate([w_rows, b_row], axis=0).astype(jnp.bfloat16)  # (K+1, 2*C4)


@jax.jit
def wide_film_layer(feature_map, condition_vector, w_fused):
    """feature_map: (B, C, 2, 2) NCHW; condition_vector: (B, K);
    w_fused: (K+1, 2*C*4) bf16 from prepare_wide_film_params.
    Returns (B, C, 2, 2), matching WideFiLMLayer.forward.
    """
    B, C, H, W = feature_map.shape
    C4 = C * H * W
    Kp1 = w_fused.shape[0]
    K = Kp1 - 1
    assert w_fused.shape == (Kp1, 2 * C4)
    assert condition_vector.shape == (B, K)

    fm_flat = feature_map.reshape(B, C4).astype(jnp.float32)
    cv_aug = jnp.concatenate(
        [condition_vector.astype(jnp.bfloat16),
         jnp.ones((B, 1), dtype=jnp.bfloat16)],
        axis=1)                                                   # (B, K+1)

    # Pad batch to a full-sublane tile (>=8); big batches tile in 128-row
    # chunks so the MXU M dimension is well fed and the grid axis can shard
    # across TensorCores on v7x.
    TB = min(_round_up(B, 8), 128)
    B_pad = _round_up(B, TB)
    if B_pad != B:
        pad = B_pad - B
        fm_flat = jnp.pad(fm_flat, ((0, pad), (0, 0)))
        cv_aug = jnp.pad(cv_aug, ((0, pad), (0, 0)))

    out_flat = pl.pallas_call(
        film_kernel,
        out_shape=jax.ShapeDtypeStruct((B_pad, C4), jnp.float32),
        grid=(B_pad // TB,),
        in_specs=[
            pl.BlockSpec((TB, Kp1), lambda i: (i, 0)),
            pl.BlockSpec((Kp1, 2 * C4), lambda i: (0, 0)),
            pl.BlockSpec((TB, C4), lambda i: (i, 0)),
        ],
        out_specs=pl.BlockSpec((TB, C4), lambda i: (i, 0)),
        compiler_params=pltpu.CompilerParams(
            dimension_semantics=("parallel",)),
    )(cv_aug, w_fused, fm_flat)

    return out_flat[:B].reshape(B, C, H, W)


if __name__ == "__main__":
    # Shapes consistent with the module: widen_factor=1 -> C = 64,
    # feature map (B, 64, 2, 2); number_known_classes = 8.
    number_known_classes = 8
    widen_factor = 1
    C = 64 * widen_factor
    C4 = C * 4
    B = 2

    key = jax.random.PRNGKey(0)
    k_fm, k_cv, k_wh, k_bh, k_wa, k_ba = jax.random.split(key, 6)

    feature_map = jax.random.normal(k_fm, (B, C, 2, 2), dtype=jnp.float32)
    condition_vector = jax.random.normal(
        k_cv, (B, number_known_classes), dtype=jnp.float32)

    # Deterministic synthetic parameters (PyTorch Linear layout: (out, in)).
    w_had = jax.random.normal(k_wh, (C4, number_known_classes), jnp.float32) * 0.05
    b_had = jax.random.normal(k_bh, (C4,), jnp.float32) * 0.05
    w_add = jax.random.normal(k_wa, (C4, number_known_classes), jnp.float32) * 0.05
    b_add = jax.random.normal(k_ba, (C4,), jnp.float32) * 0.05

    # One-time parameter prep (amortized across calls in real usage).
    w_fused = prepare_wide_film_params(w_had, b_had, w_add, b_add)

    out = wide_film_layer(feature_map, condition_vector, w_fused)
    out = jax.block_until_ready(out)

    # Reference in plain f32 JAX (mirrors the PyTorch forward exactly).
    had_ref = (condition_vector @ w_had.T + b_had).reshape(B, C, 2, 2)
    add_ref = (condition_vector @ w_add.T + b_add).reshape(B, C, 2, 2)
    ref = feature_map * had_ref + add_ref

    assert out.shape == (B, C, 2, 2)
    # Tolerance relaxed vs. v1 because the matmul inputs are bf16 (f32 accum).
    assert jnp.allclose(out, ref, atol=3e-2, rtol=3e-2), float(
        jnp.max(jnp.abs(out - ref)))

    print("KERNEL_OK")
</pallas_src>

<mosaic_0001>
module attributes {stable_mosaic.version = 11 : i64} {
  func.func @film_kernel(%arg0: i32, %arg1: memref<8x9xbf16, #tpu.memory_space<vmem>>, %arg2: memref<9x512xbf16, #tpu.memory_space<vmem>>, %arg3: memref<8x256xf32, #tpu.memory_space<vmem>>, %arg4: memref<8x256xf32, #tpu.memory_space<vmem>>) attributes {dimension_semantics = [#tpu.dimension_semantics<parallel>], iteration_bounds = array<i64: 1>, scalar_prefetch = 0 : i64, scratch_operands = 0 : i64, tpu.core_type = #tpu.core_type<tc>, window_params = [{transform_indices = @transform_0, window_bounds = array<i64: 8, 9>}, {pipeline_mode = #tpu.pipeline_mode<synchronous>, transform_indices = @transform_1, window_bounds = array<i64: 9, 512>}, {transform_indices = @transform_2, window_bounds = array<i64: 8, 256>}, {transform_indices = @transform_3, window_bounds = array<i64: 8, 256>}]} {
    %c0 = arith.constant 0 : index
    %c0_0 = arith.constant 0 : index
    %0 = vector.load %arg1[%c0, %c0_0] : memref<8x9xbf16, #tpu.memory_space<vmem>>, vector<8x9xbf16>
    %c0_1 = arith.constant 0 : index
    %c0_2 = arith.constant 0 : index
    %1 = vector.load %arg2[%c0_1, %c0_2] : memref<9x512xbf16, #tpu.memory_space<vmem>>, vector<9x512xbf16>
    %cst = arith.constant dense<0.000000e+00> : vector<8x512xf32>
    %2 = tpu.matmul %0, %1, %cst {dimension_numbers = #tpu.dot_dimension_numbers<[1], [0], [0], [1], [0, 0, 1, 1], [], []>} : vector<8x9xbf16>, vector<9x512xbf16>, vector<8x512xf32> -> vector<8x512xf32>
    %3 = vector.extract_strided_slice %2 {offsets = [0, 0], sizes = [8, 256], strides = [1, 1]} : vector<8x512xf32> to vector<8x256xf32>
    %4 = vector.extract_strided_slice %2 {offsets = [0, 256], sizes = [8, 256], strides = [1, 1]} : vector<8x512xf32> to vector<8x256xf32>
    %c0_3 = arith.constant 0 : index
    %c0_4 = arith.constant 0 : index
    %5 = vector.load %arg3[%c0_3, %c0_4] : memref<8x256xf32, #tpu.memory_space<vmem>>, vector<8x256xf32>
    %6 = arith.mulf %5, %3 : vector<8x256xf32>
    %7 = arith.addf %6, %4 : vector<8x256xf32>
    %c0_5 = arith.constant 0 : index
    %c0_6 = arith.constant 0 : index
    %8 = vector.load %arg4[%c0_5, %c0_6] : memref<8x256xf32, #tpu.memory_space<vmem>>, vector<8x256xf32>
    tpu.vector_store %arg4[%c0_5, %c0_6], %7 {strides = array<i32>} : memref<8x256xf32, #tpu.memory_space<vmem>>, vector<8x256xf32>,
    return
  }
  func.func @transform_0(%arg0: i32) -> (i32, i32) {
    %c0_i32 = arith.constant 0 : i32
    %c0_i32_0 = arith.constant 0 : i32
    return %arg0, %c0_i32 : i32, i32
  }
  func.func @transform_1(%arg0: i32) -> (i32, i32) {
    %c0_i32 = arith.constant 0 : i32
    %c0_i32_0 = arith.constant 0 : i32
    %c0_i32_1 = arith.constant 0 : i32
    return %c0_i32, %c0_i32_0 : i32, i32
  }
  func.func @transform_2(%arg0: i32) -> (i32, i32) {
    %c0_i32 = arith.constant 0 : i32
    %c0_i32_0 = arith.constant 0 : i32
    return %arg0, %c0_i32 : i32, i32
  }
  func.func @transform_3(%arg0: i32) -> (i32, i32) {
    %c0_i32 = arith.constant 0 : i32
    %c0_i32_0 = arith.constant 0 : i32
    return %arg0, %c0_i32 : i32, i32
  }
}

</mosaic_0001>

<llo_original>
// kernel: wide_film_layer.1
$region0: #{wide_film_layer.1}
  #allocation0 [shape = 'u32[]', space=smem, size = 0x4, offset = 0x4, fixed_abs, tag = 'smem constant byte address 0x4 - core index']
  #allocation1 [shape = 'u32[72,128]{1,0:T(1,128)}', space=vmem, size = 0x9000, scoped, tag = 'internal scratch']
  %s0 = inlined_call_operand.vmem [shape: bf16[8,9], index: 0, kind: input, shape index: {}]
  %s1 = inlined_call_operand.vmem [shape: bf16[9,512], index: 1, kind: input, shape index: {}]
  %s2 = inlined_call_operand.vmem [shape: f32[8,256], index: 2, kind: input, shape index: {}]
  %s3 = inlined_call_operand.vmem [shape: f32[8,256], index: 3, kind: output, shape index: {}]
  %s4 = sld [smem:[#allocation0]]
  $region22: #{wide_film_layer.1} parent=0
    _
  %s6 = ssub.s32 1, %s4
  %s7 = scalar_select 0, %s6, %s4
  // Predicated region
  $region2: #{wide_film_layer.1} parent=0 // pred_check
    _
  $region3: #{wide_film_layer.1} parent=0 // pred_check_branch
    %9 = sbr.rel (0) target = $region5
  $region4: #{wide_film_layer.1} parent=0 // pred_region
    _
  $region5: #{wide_film_layer.1} parent=0 // pred_fallthru
    _
  // Predicated region
  $region6: #{wide_film_layer.1} parent=0 // pred_check
    _
  $region7: #{wide_film_layer.1} parent=0 // pred_check_branch
    %11 = sbr.rel (0) target = $region9
  $region8: #{wide_film_layer.1} parent=0 // pred_region
    _
  $region9: #{wide_film_layer.1} parent=0 // pred_fallthru
    _
  // Predicated region
  $region10: #{wide_film_layer.1} parent=0 // pred_check
    _
  $region11: #{wide_film_layer.1} parent=0 // pred_check_branch
    %13 = sbr.rel (0) target = $region13
  $region12: #{wide_film_layer.1} parent=0 // pred_region
    _
  $region13: #{wide_film_layer.1} parent=0 // pred_fallthru
    _
  %v15 = vld [vmem:[%s0] sm:$0xf]
  %v16 = vld [vmem:[%s1] sm:$0xff]
  %v17 = vld [vmem:[%s1 + $0x8] sm:$0xff]
  %v18 = vld [vmem:[%s1 + $0x10] sm:$0x11]
  %v19 = vld [vmem:[%s1 + $0x18] sm:$0x11]
  %v24 = vunpack.c.l.b16 %v16
  %v25 = vunpack.c.h.b16 %v16
  %v26 = vunpack.c.l.b16 %v17
  %v27 = vunpack.c.h.b16 %v17
  %v28 = vunpack.c.l.b16 %v18
  %v29 = vunpack.c.h.b16 %v18
  %v30 = vunpack.c.l.b16 %v19
  %v31 = vunpack.c.h.b16 %v19
  %v32 = vpack.c.b16 %v28, %v24
  %v33 = vpack.c.b16 %v29, %v25
  %v34 = vpack.c.b16 %v30, %v26
  %v35 = vpack.c.b16 %v31, %v27
  %vm36 = vcmask 72704
  %v38 = vsel %vm36, %v15, 0
  %vm40 = vcmask 1043456
  %vm41 = vcmask 1044480
  %v42 = vsel %vm40, 4294967295, 65535
  %v43 = vsel %vm41, %v42, 0
  %v45 = vand.u32 %v32, %v43
  %v48 = vand.u32 %v33, %v43
  %v51 = vand.u32 %v34, %v43
  %v54 = vand.u32 %v35, %v43
  %56 = vmatpush.bf16.msra.mxu0 0
  %57 = vmatpush.bf16.msra.mxu0 0
  %58 = vmatpush.bf16.msra.mxu0 0
  %59 = vmatpush.bf16.msra.mxu0 0
  %60 = vmatpush.bf16.msra.mxu0 0
  %61 = vmatpush.bf16.msra.mxu0 0
  %62 = vmatpush.bf16.msra.mxu0 0
  %63 = vmatpush.bf16.msra.mxu0 %v45
  %64 = vmatmul.bf16.gmra.mxu0 %v38
  %v65 = vpop.f32.mrf.mxu0
  %v66 = vadd.f32 0.0, %v65
  %v67 = vpop.f32.mrf.mxu0
  %68 = vdwg.mxu0
  %69 = vmatpush.bf16.msra.mxu0 0
  %70 = vmatpush.bf16.msra.mxu0 0
  %71 = vmatpush.bf16.msra.mxu0 0
  %72 = vmatpush.bf16.msra.mxu0 0
  %73 = vmatpush.bf16.msra.mxu0 0
  %74 = vmatpush.bf16.msra.mxu0 0
  %75 = vmatpush.bf16.msra.mxu0 0
  %76 = vmatpush.bf16.msra.mxu0 %v48
  %77 = vmatmul.bf16.gmra.mxu0 %v38
  %v78 = vpop.f32.mrf.mxu0
  %v79 = vadd.f32 0.0, %v78
  %v80 = vpop.f32.mrf.mxu0
  %81 = vdwg.mxu0
  %82 = vmatpush.bf16.msra.mxu0 0
  %83 = vmatpush.bf16.msra.mxu0 0
  %84 = vmatpush.bf16.msra.mxu0 0
  %85 = vmatpush.bf16.msra.mxu0 0
  %86 = vmatpush.bf16.msra.mxu0 0
  %87 = vmatpush.bf16.msra.mxu0 0
  %88 = vmatpush.bf16.msra.mxu0 0
  %89 = vmatpush.bf16.msra.mxu0 %v51
  %90 = vmatmul.bf16.gmra.mxu0 %v38
  %v91 = vpop.f32.mrf.mxu0
  %v92 = vadd.f32 0.0, %v91
  %v93 = vpop.f32.mrf.mxu0
  %94 = vdwg.mxu0
  %95 = vmatpush.bf16.msra.mxu0 0
  %96 = vmatpush.bf16.msra.mxu0 0
  %97 = vmatpush.bf16.msra.mxu0 0
  %98 = vmatpush.bf16.msra.mxu0 0
  %99 = vmatpush.bf16.msra.mxu0 0
  %100 = vmatpush.bf16.msra.mxu0 0
  %101 = vmatpush.bf16.msra.mxu0 0
  %102 = vmatpush.bf16.msra.mxu0 %v54
  %103 = vmatmul.bf16.gmra.mxu0 %v38
  %v104 = vpop.f32.mrf.mxu0
  %v105 = vadd.f32 0.0, %v104
  %v106 = vpop.f32.mrf.mxu0
  %107 = vdwg.mxu0
  %v108 = vld [vmem:[%s2] sm:$0xff]
  %v109 = vld [vmem:[%s2 + $0x8] sm:$0xff]
  %v110 = vmul.f32 %v108, %v66
  %v111 = vmul.f32 %v109, %v79
  %v112 = vadd.f32 %v110, %v92
  %v113 = vadd.f32 %v111, %v105
  %114 = vst [vmem:[%s3] sm:$0xff] %v112
  %115 = vst [vmem:[%s3 + $0x8] sm:$0xff] %v113
  // Predicated region
  $region14: #{wide_film_layer.1} parent=0 // pred_check
    _
  $region15: #{wide_film_layer.1} parent=0 // pred_check_branch
    %117 = sbr.rel (0) target = $region17
  $region16: #{wide_film_layer.1} parent=0 // pred_region
    _
  $region17: #{wide_film_layer.1} parent=0 // pred_fallthru
    _
  // Predicated region
  $region18: #{wide_film_layer.1} parent=0 // pred_check
    _
  $region19: #{wide_film_layer.1} parent=0 // pred_check_branch
    %119 = sbr.rel (0) target = $region21
  $region20: #{wide_film_layer.1} parent=0 // pred_region
    _
  $region21: #{wide_film_layer.1} parent=0 // pred_fallthru
    _

</llo_original>
